<compile_context>
chip_gen: v5e
topology: v5e:2x2
jax: 0.10.0
libtpu: 0.0.40
codegen_flags: <defaults>
</compile_context>

<pallas_src>
import functools

import numpy as np
import jax
import jax.numpy as jnp
from jax import lax
from jax.experimental import pallas as pl
from jax.experimental.pallas import tpu as pltpu

NEG_SLOPE_OUT = 0.01        # F.leaky_relu default slope between layers
_BIG_NEG = 1e30
PADF = 128                  # lane-padded node-feature width
PADH = 128                  # lane-padded width of each packed projection segment


# ------------------------------ kernels ----------------------------------- #

def proj_kernel(x_ref, w_ref, b_ref, qs_ref, kv_ref, *, mxu_dtype):
    """One fused projection matmul per layer: x @ [Wq|Wskip|Wk|Wv] + b."""
    p = jnp.dot(x_ref[...].astype(mxu_dtype), w_ref[...],
                preferred_element_type=jnp.float32) + b_ref[...]
    qs_ref[...] = p[:, :2 * PADH].astype(qs_ref.dtype)   # [q | skip]
    kv_ref[...] = p[:, 2 * PADH:].astype(kv_ref.dtype)   # [k | v]


def attn_kernel(qs_ref, kv_ref, bias_ref, ea0_ref, ea1_ref, we_ref, out_ref,
                *, H, C, act_slope, mxu_dtype):
    """TransformerConv attention for one tile of target rows (all heads)."""
    f32 = jnp.float32
    qs = qs_ref[...]                                   # (TM, 2*PADH)
    kv = kv_ref[...]                                   # (N,  2*PADH)
    q_all = qs[:, :PADH] * (1.0 / float(np.sqrt(C)))   # scale folded into q
    skip = qs[:, PADH:]                                # padded cols are zero
    k_all = kv[:, :PADH]
    v_all = kv[:, PADH:]

    bias = bias_ref[...].astype(f32)                   # (TM, N) 0 / -1e30
    ea0 = ea0_ref[...]                                 # (TM, N)
    ea1 = ea1_ref[...]
    we_all = we_ref[...]                               # (2, H*C)

    # zero-in-degree guard: rows whose bias has no exact-0 (edge) entry
    has_in = jnp.sum((bias == 0.0).astype(f32), axis=1, keepdims=True) > 0.0

    head_outs = []
    for hd in range(H):                                # tiny head count, unrolled
        sl = slice(hd * C, (hd + 1) * C)
        qh, kh, vh = q_all[:, sl], k_all[:, sl], v_all[:, sl]
        weh = we_all[:, sl]                            # (2, C)
        # <q_i, k_j>: (TM, N) on the MXU, lane-dense over sources
        qk = lax.dot_general(qh.astype(mxu_dtype), kh.astype(mxu_dtype),
                             (((1,), (1,)), ((), ())),
                             preferred_element_type=f32)
        # <q_i, We0/1> on the MXU (edge term factors through the 2 channels)
        qe = lax.dot_general(qh, weh, (((1,), (1,)), ((), ())),
                             preferred_element_type=f32)          # (TM, 2)
        logits = qk + qe[:, 0:1] * ea0 + qe[:, 1:2] * ea1 + bias
        m = jnp.max(logits, axis=1, keepdims=True)
        p = jnp.exp(logits - m)                        # non-edges underflow to 0
        inv = 1.0 / jnp.sum(p, axis=1, keepdims=True)  # exact (parity-critical)
        alpha = p * inv
        # sum_j alpha_ij v_j (MXU) + factored edge aggregation
        agg = jnp.dot(alpha.astype(mxu_dtype), vh.astype(mxu_dtype),
                      preferred_element_type=f32)
        a0 = jnp.sum(alpha * ea0, axis=1, keepdims=True)
        a1 = jnp.sum(alpha * ea1, axis=1, keepdims=True)
        head_outs.append(agg + a0 * weh[0:1, :] + a1 * weh[1:2, :])

    att = head_outs[0] if H == 1 else jnp.concatenate(head_outs, axis=-1)
    hc = H * C
    if hc < PADH:                                      # keep store lane-dense
        att = jnp.concatenate(
            [att, jnp.zeros((att.shape[0], PADH - hc), f32)], axis=-1)
    att = jnp.where(has_in, att, 0.0)                  # zero-in-degree rows
    out = att + skip                                   # root_weight path
    if act_slope is not None:                          # fused leaky_relu
        out = jnp.where(out > 0, out, act_slope * out)
    out_ref[...] = out.astype(out_ref.dtype)           # single (TM,128) store


# ------------------------------ wrapper ------------------------------------ #

def transform_forward(x, bias, ea0, ea1, packed_params, cfgs,
                      mxu_dtype=jnp.bfloat16, row_tile=256,
                      vmem_limit=48 * 1024 * 1024):
    """3-layer TransformerConv forward; per layer: projection + attention call."""
    N, f_in = x.shape
    tm = N if N <= row_tile else row_tile
    assert N % tm == 0, "N must be a multiple of the row tile"  # TODO(synk): pad N
    # lane-dense input slab (features padded to 128)
    h = jnp.zeros((N, PADF), jnp.float32).at[:, :f_in].set(x)

    cp = pltpu.CompilerParams(dimension_semantics=("parallel",),
                              vmem_limit_bytes=vmem_limit)
    n_layers = len(cfgs)
    for li, ((H, C), (w_pack, b_pack, we)) in enumerate(zip(cfgs, packed_params)):
        w_m = w_pack.astype(mxu_dtype)
        # ---- fused projections for all nodes: one (N,128)@(128,512) matmul ----
        qs, kvs = pl.pallas_call(
            functools.partial(proj_kernel, mxu_dtype=mxu_dtype),
            grid=(N // tm,),
            in_specs=[pl.BlockSpec((tm, PADF), lambda i: (i, 0)),
                      pl.BlockSpec((PADF, 4 * PADH), lambda i: (0, 0)),
                      pl.BlockSpec((1, 4 * PADH), lambda i: (0, 0))],
            out_specs=(pl.BlockSpec((tm, 2 * PADH), lambda i: (i, 0)),
                       pl.BlockSpec((tm, 2 * PADH), lambda i: (i, 0))),
            out_shape=(jax.ShapeDtypeStruct((N, 2 * PADH), jnp.float32),
                       jax.ShapeDtypeStruct((N, 2 * PADH), jnp.float32)),
            compiler_params=cp,
        )(h, w_m, b_pack)

        # ---- attention, tiled over target rows (parallel across TCs) ----
        act = NEG_SLOPE_OUT if li < n_layers - 1 else None
        h = pl.pallas_call(
            functools.partial(attn_kernel, H=H, C=C, act_slope=act,
                              mxu_dtype=mxu_dtype),
            grid=(N // tm,),
            in_specs=[pl.BlockSpec((tm, 2 * PADH), lambda i: (i, 0)),  # q|skip tile
                      pl.BlockSpec((N, 2 * PADH), lambda i: (0, 0)),   # k|v all nodes
                      pl.BlockSpec((tm, N), lambda i: (i, 0)),         # additive bias
                      pl.BlockSpec((tm, N), lambda i: (i, 0)),         # ea0
                      pl.BlockSpec((tm, N), lambda i: (i, 0)),         # ea1
                      pl.BlockSpec((2, H * C), lambda i: (0, 0))],     # We
            out_specs=pl.BlockSpec((tm, PADH), lambda i: (i, 0)),
            out_shape=jax.ShapeDtypeStruct((N, PADH), jnp.float32),
            compiler_params=cp,
        )(qs, kvs, bias, ea0, ea1, we)

    H_last, C_last = cfgs[-1]
    return h[:, :H_last * C_last]


# ----------------------------- glue / params ------------------------------ #

def init_transformer_params(key, fin, emb, heads):
    ks = jax.random.split(key, 9)

    def glorot(k, shape):
        s = np.sqrt(2.0 / (shape[0] + shape[1]))
        return jax.random.normal(k, shape, jnp.float32) * s

    hc = heads * emb
    wq = glorot(ks[0], (fin, hc))
    wk = glorot(ks[1], (fin, hc))
    wv = glorot(ks[2], (fin, hc))
    we = glorot(ks[3], (2, hc))                 # lin_edge (bias=False in PyG)
    wsk = glorot(ks[4], (fin, hc))              # lin_skip (root_weight=True)
    bq = jax.random.normal(ks[5], (1, hc), jnp.float32) * 0.01
    bk = jax.random.normal(ks[6], (1, hc), jnp.float32) * 0.01
    bv = jax.random.normal(ks[7], (1, hc), jnp.float32) * 0.01
    bsk = jax.random.normal(ks[8], (1, hc), jnp.float32) * 0.01
    # NOTE: init differs from PyG defaults; port torch weights for exact parity.
    return (wq, bq, wk, bk, wv, bv, we, wsk, bsk)


def pack_layer_params(params, f_in, H, C):
    """Pack [Wq|Wskip|Wk|Wv] into one lane-padded (128, 512) weight + bias row."""
    wq, bq, wk, bk, wv, bv, we, wsk, bsk = params
    hc = H * C
    assert f_in <= PADF and hc <= PADH
    w = np.zeros((PADF, 4 * PADH), np.float32)
    b = np.zeros((1, 4 * PADH), np.float32)
    for seg, (wm, bm) in enumerate(((wq, bq), (wsk, bsk), (wk, bk), (wv, bv))):
        w[:f_in, seg * PADH: seg * PADH + hc] = np.asarray(wm)
        b[0, seg * PADH: seg * PADH + hc] = np.asarray(bm).reshape(-1)
    return jnp.asarray(w), jnp.asarray(b), jnp.asarray(we)


def build_dense_graph(edge_index, edge_attr, num_nodes):
    """Densify edges into (tgt, src) additive bias + 2 edge channels."""
    src = np.asarray(edge_index[0])
    dst = np.asarray(edge_index[1])
    attr = np.asarray(edge_attr, np.float32)
    mask = np.zeros((num_nodes, num_nodes), np.float32)      # (tgt, src)
    ea0 = np.zeros_like(mask)
    ea1 = np.zeros_like(mask)
    mask[dst, src] = 1.0
    ea0[dst, src] = attr[:, 0]
    ea1[dst, src] = attr[:, 1]
    bias = (mask - 1.0) * _BIG_NEG        # 0 on edges, -1e30 elsewhere
    # bias in bf16 (values are exactly 0 or a huge negative -> bit-exact masking)
    # TODO(synk): store ea0/ea1 as bf16 at large N; kept f32 for strict parity.
    return (jnp.asarray(bias, jnp.bfloat16), jnp.asarray(ea0), jnp.asarray(ea1),
            jnp.asarray(mask))


def transformer_conv_ref(x, mask, eattr, params, heads, emb, out_slope):
    """Pure-JAX dense reference of one TransformerConv layer (self-check)."""
    wq, bq, wk, bk, wv, bv, we, wsk, bsk = params
    N = x.shape[0]
    H, C = heads, emb
    q = (x @ wq + bq).reshape(N, H, C)
    k = (x @ wk + bk).reshape(N, H, C)
    v = (x @ wv + bv).reshape(N, H, C)
    skip = x @ wsk + bsk
    e = jnp.einsum('kij,kf->ijf', eattr, we).reshape(N, N, H, C)
    logits = (jnp.einsum('ihc,jhc->ijh', q, k)
              + jnp.einsum('ihc,ijhc->ijh', q, e)) / np.sqrt(C)
    logits = jnp.where(mask[:, :, None] > 0, logits, -_BIG_NEG)
    m = logits.max(axis=1, keepdims=True)
    p = jnp.exp(logits - m) * mask[:, :, None]
    alpha = p / jnp.maximum(p.sum(axis=1, keepdims=True), 1e-20)
    out = (jnp.einsum('ijh,jhc->ihc', alpha, v)
           + jnp.einsum('ijh,ijhc->ihc', alpha, e)).reshape(N, H * C) + skip
    if out_slope is not None:
        out = jnp.where(out > 0, out, out_slope * out)
    return out


if __name__ == "__main__":
    key = jax.random.PRNGKey(0)
    N, F_IN, EMB, HEADS = 16, 4, 8, 2
    k_x, k_e, k1, k2, k3 = jax.random.split(key, 5)

    # node features
    x = jax.random.normal(k_x, (N, F_IN), jnp.float32)
    # bidirectional ring graph, minus all edges into node N-1
    # (exercises the zero-in-degree guard), edge_dim = 2
    s_ = np.arange(N)
    d_ = (s_ + 1) % N
    src = np.concatenate([s_, d_])
    dst = np.concatenate([d_, s_])
    keep_e = dst != (N - 1)
    edge_index = np.stack([src[keep_e], dst[keep_e]])
    edge_attr = np.asarray(
        jax.random.normal(k_e, (edge_index.shape[1], 2), jnp.float32))

    bias, ea0, ea1, mask = build_dense_graph(edge_index, edge_attr, N)

    # conv1: F_IN -> EMB, heads=HEADS (concat); conv2/conv3 lazy (-1) resolve
    p1 = init_transformer_params(k1, F_IN, EMB, HEADS)
    p2 = init_transformer_params(k2, HEADS * EMB, EMB, 1)
    p3 = init_transformer_params(k3, EMB, EMB, 1)
    cfgs = ((HEADS, EMB), (1, EMB), (1, EMB))
    packed = [pack_layer_params(p, f, H, C)
              for p, f, (H, C) in zip((p1, p2, p3),
                                      (F_IN, HEADS * EMB, EMB), cfgs)]

    # strict-parity run: f32 MXU inputs, small row tile so the grid has >1 step
    out = transform_forward(x, bias, ea0, ea1, packed, cfgs,
                            mxu_dtype=jnp.float32, row_tile=8)
    out = jax.block_until_ready(out)

    # pure-JAX dense reference of the same module
    eattr = jnp.stack([ea0, ea1])
    h = transformer_conv_ref(x, mask, eattr, p1, HEADS, EMB, NEG_SLOPE_OUT)
    h = transformer_conv_ref(h, mask, eattr, p2, 1, EMB, NEG_SLOPE_OUT)
    ref = transformer_conv_ref(h, mask, eattr, p3, 1, EMB, None)
    err = float(np.max(np.abs(np.asarray(out) - np.asarray(ref))))
    assert np.allclose(np.asarray(out), np.asarray(ref),
                       atol=2e-3, rtol=2e-3), f"max abs err {err}"

    # production path (bf16 MXU operands, f32 accumulate): run + sanity check
    out_bf16 = jax.block_until_ready(
        transform_forward(x, bias, ea0, ea1, packed, cfgs,
                          mxu_dtype=jnp.bfloat16))
    assert np.all(np.isfinite(np.asarray(out_bf16)))

    print("KERNEL_OK")
</pallas_src>

<mosaic_0001>
module attributes {stable_mosaic.version = 11 : i64} {
  func.func @proj_kernel(%arg0: i32, %arg1: memref<8x128xf32, #tpu.memory_space<vmem>>, %arg2: memref<128x512xf32, #tpu.memory_space<vmem>>, %arg3: memref<1x512xf32, #tpu.memory_space<vmem>>, %arg4: memref<8x256xf32, #tpu.memory_space<vmem>>, %arg5: memref<8x256xf32, #tpu.memory_space<vmem>>) attributes {dimension_semantics = [#tpu.dimension_semantics<parallel>], iteration_bounds = array<i64: 2>, scalar_prefetch = 0 : i64, scratch_operands = 0 : i64, tpu.core_type = #tpu.core_type<tc>, window_params = [{transform_indices = @transform_0, window_bounds = array<i64: 8, 128>}, {pipeline_mode = #tpu.pipeline_mode<synchronous>, transform_indices = @transform_1, window_bounds = array<i64: 128, 512>}, {pipeline_mode = #tpu.pipeline_mode<synchronous>, transform_indices = @transform_2, window_bounds = array<i64: 1, 512>}, {transform_indices = @transform_3, window_bounds = array<i64: 8, 256>}, {transform_indices = @transform_4, window_bounds = array<i64: 8, 256>}]} {
    %c0 = arith.constant 0 : index
    %c0_0 = arith.constant 0 : index
    %0 = vector.load %arg1[%c0, %c0_0] : memref<8x128xf32, #tpu.memory_space<vmem>>, vector<8x128xf32>
    %c0_1 = arith.constant 0 : index
    %c0_2 = arith.constant 0 : index
    %1 = vector.load %arg2[%c0_1, %c0_2] : memref<128x512xf32, #tpu.memory_space<vmem>>, vector<128x512xf32>
    %cst = arith.constant dense<0.000000e+00> : vector<8x512xf32>
    %2 = tpu.matmul %0, %1, %cst {dimension_numbers = #tpu.dot_dimension_numbers<[1], [0], [0], [1], [0, 0, 1, 1], [], []>} : vector<8x128xf32>, vector<128x512xf32>, vector<8x512xf32> -> vector<8x512xf32>
    %c0_3 = arith.constant 0 : index
    %c0_4 = arith.constant 0 : index
    %3 = vector.load %arg3[%c0_3, %c0_4] : memref<1x512xf32, #tpu.memory_space<vmem>>, vector<1x512xf32>
    %4 = vector.broadcast %3 : vector<1x512xf32> to vector<8x512xf32>
    %5 = arith.addf %2, %4 : vector<8x512xf32>
    %6 = vector.extract_strided_slice %5 {offsets = [0, 0], sizes = [8, 256], strides = [1, 1]} : vector<8x512xf32> to vector<8x256xf32>
    %c0_5 = arith.constant 0 : index
    %c0_6 = arith.constant 0 : index
    %7 = vector.load %arg4[%c0_5, %c0_6] : memref<8x256xf32, #tpu.memory_space<vmem>>, vector<8x256xf32>
    tpu.vector_store %arg4[%c0_5, %c0_6], %6 {strides = array<i32>} : memref<8x256xf32, #tpu.memory_space<vmem>>, vector<8x256xf32>,
    %8 = vector.extract_strided_slice %5 {offsets = [0, 256], sizes = [8, 256], strides = [1, 1]} : vector<8x512xf32> to vector<8x256xf32>
    %c0_7 = arith.constant 0 : index
    %c0_8 = arith.constant 0 : index
    %9 = vector.load %arg5[%c0_7, %c0_8] : memref<8x256xf32, #tpu.memory_space<vmem>>, vector<8x256xf32>
    tpu.vector_store %arg5[%c0_7, %c0_8], %8 {strides = array<i32>} : memref<8x256xf32, #tpu.memory_space<vmem>>, vector<8x256xf32>,
    return
  }
  func.func @transform_0(%arg0: i32) -> (i32, i32) {
    %c0_i32 = arith.constant 0 : i32
    %c0_i32_0 = arith.constant 0 : i32
    return %arg0, %c0_i32 : i32, i32
  }
  func.func @transform_1(%arg0: i32) -> (i32, i32) {
    %c0_i32 = arith.constant 0 : i32
    %c0_i32_0 = arith.constant 0 : i32
    %c0_i32_1 = arith.constant 0 : i32
    return %c0_i32, %c0_i32_0 : i32, i32
  }
  func.func @transform_2(%arg0: i32) -> (i32, i32) {
    %c0_i32 = arith.constant 0 : i32
    %c0_i32_0 = arith.constant 0 : i32
    %c0_i32_1 = arith.constant 0 : i32
    return %c0_i32, %c0_i32_0 : i32, i32
  }
  func.func @transform_3(%arg0: i32) -> (i32, i32) {
    %c0_i32 = arith.constant 0 : i32
    %c0_i32_0 = arith.constant 0 : i32
    return %arg0, %c0_i32 : i32, i32
  }
  func.func @transform_4(%arg0: i32) -> (i32, i32) {
    %c0_i32 = arith.constant 0 : i32
    %c0_i32_0 = arith.constant 0 : i32
    return %arg0, %c0_i32 : i32, i32
  }
}

</mosaic_0001>

<llo_original>
// kernel: tpu_custom_call.1
$region0: #{tpu_custom_call.1}
  #allocation0 [shape = 'u32[]', space=smem, size = 0x4, offset = 0x4, fixed_abs, tag = 'smem constant byte address 0x4 - core index']
  #allocation1 [shape = 'u32[72,128]{1,0:T(1,128)}', space=vmem, size = 0x9000, scoped, tag = 'internal scratch']
  %s0 = inlined_call_operand.hbm [shape: f32[16,128], index: 0, kind: input, shape index: {}]
  %s1 = inlined_call_operand.hbm [shape: f32[128,512], index: 1, kind: input, shape index: {}]
  %s2 = inlined_call_operand.hbm [shape: f32[1,512], index: 2, kind: input, shape index: {}]
  %s3 = inlined_call_operand.hbm [shape: f32[16,256], index: 3, kind: output, shape index: {0}]
  %s4 = inlined_call_operand.hbm [shape: f32[16,256], index: 4, kind: output, shape index: {1}]
  %5 = xla_tuple %s3, %s4
  %s6 = sld [smem:[#allocation0]]
  $region65: #{tpu_custom_call.1} parent=0
    _
  %s8 = ssub.s32 1, %s6
  %s9 = scalar_select 0, %s8, %s6
  $region1: #{tpu_custom_call.1} parent=0
    #allocation2 [shape = 'u8[8192]{0}', space=vmem, size = 0x2000, scoped, tag = 'input window, operand 0']
    #allocation3 [shape = 's32[2]{0}', space=sflag, size = 0x8, scoped, tag = 'scoped memory for tpu_custom_call.1']
    #allocation4 [shape = 's32[2]{0}', space=sflag, size = 0x8, scoped, tag = 'scoped memory for tpu_custom_call.1']
    #allocation5 [shape = 'u8[262144]{0}', space=vmem, size = 0x40000, scoped, tag = 'input window, operand 1, single buffered']
    #allocation6 [shape = 's32[1]{0}', space=sflag, size = 0x4, scoped, tag = 'scoped memory for tpu_custom_call.1']
    #allocation7 [shape = 'u8[2048]{0}', space=vmem, size = 0x800, scoped, tag = 'input window, operand 2, single buffered']
    #allocation8 [shape = 'u8[16384]{0}', space=vmem, size = 0x4000, scoped, tag = 'output window, operand 0']
    #allocation9 [shape = 'u8[16384]{0}', space=vmem, size = 0x4000, scoped, tag = 'output window, operand 1']
    #allocation10 [shape = 's32[2]{0}', space=sflag, size = 0x8, scoped, tag = 'scoped memory for tpu_custom_call.1']
    %10 = vsyncpa [#allocation3], 0
    %s11 = scalar_lea.sflag [#allocation3], 1
    %12 = vsyncpa %s11, 0
    %13 = vsyncpa [#allocation6], 0
    %14 = vsyncpa [#allocation4], 0
    %s15 = scalar_lea.sflag [#allocation4], 1
    %16 = vsyncpa %s15, 0
    %17 = vsyncpa [#allocation10], 0
    %s18 = scalar_lea.sflag [#allocation10], 1
    %19 = vsyncpa %s18, 0
    loop: start=0, step=1, limit=4
    $region2: #{tpu_custom_call.1} parent=1 // loop_pre_header
      _
    $region3: #{tpu_custom_call.1} parent=1 // loop_header
      %s21 = sphi 0, %s25
      %p22 = scmp.ge.s32.totalorder %s21, 4
      %s31 = sphi 0, %s33
      %s34 = sphi 0, %s31
      %s35 = sphi 0, %s34
      %s51 = sphi 0, %s35
      %s55 = sphi 0, %s55
      %s57 = sphi 0, %s55
      %s58 = sphi 0, %s57
      %s72 = sphi 0, %s58
      %s76 = sphi 0, %s76
      %s78 = sphi 0, %s76
      %s79 = sphi 0, %s78
      %s93 = sphi 0, %s79
      %s99 = sphi 0, %s101
      %s102 = sphi 0, %s99
      %s103 = sphi 0, %s102
      %s119 = sphi 0, %s103
      %s125 = sphi 0, %s127
      %s128 = sphi 0, %s125
      %s129 = sphi 0, %s128
      %s145 = sphi 0, %s129
    $region4: #{tpu_custom_call.1} parent=1 // loop_header_branch
      %24 = sbr.rel (%p22) target = $region8
    $region5: #{tpu_custom_call.1} parent=1 // loop_body
      %s26 = ssub.s32 %s21, 1
      %s27 = ssub.s32 %s21, 2
      %s28 = sadd.s32 %s21, 1
      %s29 = ssub.s32 %s21, %s28
      %p30 = scmp.eq.s32.totalorder %s29, 0
      %s32 = sadd.s32 %s31, 1
      %s33 = scalar_select %p30, %s31, %s32
      %p36 = pneg %p30
      %p37 = scmp.eq.s32.totalorder %s21, 1
      %p38 = por %p36, %p37
      %p39 = scmp.ne.s32.totalorder %s31, %s34
      %p40 = scmp.eq.s32.totalorder %s21, 0
      %p41 = por %p39, %p40
      %p42 = scmp.ne.s32.totalorder %s31, %s34
      %p43 = scmp.eq.s32.totalorder %s26, 1
      %p44 = por %p42, %p43
      %p45 = scmp.ne.s32.totalorder %s34, %s35
      %p46 = scmp.eq.s32.totalorder %s26, 0
      %p47 = por %p45, %p46
      %p48 = scmp.ne.s32.totalorder %s34, %s35
      %p49 = scmp.eq.s32.totalorder %s27, 1
      %p50 = por %p48, %p49
      %p52 = scmp.ne.s32.totalorder %s35, %s51
      %p53 = scmp.eq.s32.totalorder %s27, 0
      %p54 = por %p52, %p53
      %s56 = sadd.s32 %s55, 1
      %p59 = scmp.eq.s32.totalorder %s21, 1
      %p60 = scmp.ne.s32.totalorder %s55, %s57
      %p61 = scmp.eq.s32.totalorder %s21, 0
      %p62 = por %p60, %p61
      %p63 = scmp.ne.s32.totalorder %s55, %s57
      %p64 = scmp.eq.s32.totalorder %s26, 1
      %p65 = por %p63, %p64
      %p66 = scmp.ne.s32.totalorder %s57, %s58
      %p67 = scmp.eq.s32.totalorder %s26, 0
      %p68 = por %p66, %p67
      %p69 = scmp.ne.s32.totalorder %s57, %s58
      %p70 = scmp.eq.s32.totalorder %s27, 1
      %p71 = por %p69, %p70
      %p73 = scmp.ne.s32.totalorder %s58, %s72
      %p74 = scmp.eq.s32.totalorder %s27, 0
      %p75 = por %p73, %p74
      %s77 = sadd.s32 %s76, 1
      %p80 = scmp.eq.s32.totalorder %s21, 1
      %p81 = scmp.ne.s32.totalorder %s76, %s78
      %p82 = scmp.eq.s32.totalorder %s21, 0
      %p83 = por %p81, %p82
      %p84 = scmp.ne.s32.totalorder %s76, %s78
      %p85 = scmp.eq.s32.totalorder %s26, 1
      %p86 = por %p84, %p85
      %p87 = scmp.ne.s32.totalorder %s78, %s79
      %p88 = scmp.eq.s32.totalorder %s26, 0
      %p89 = por %p87, %p88
      %p90 = scmp.ne.s32.totalorder %s78, %s79
      %p91 = scmp.eq.s32.totalorder %s27, 1
      %p92 = por %p90, %p91
      %p94 = scmp.ne.s32.totalorder %s79, %s93
      %p95 = scmp.eq.s32.totalorder %s27, 0
      %p96 = por %p94, %p95
      %s97 = ssub.s32 %s21, %s28
      %p98 = scmp.eq.s32.totalorder %s97, 0
      %s100 = sadd.s32 %s99, 1
      %s101 = scalar_select %p98, %s99, %s100
      %p104 = pneg %p98
      %p105 = scmp.eq.s32.totalorder %s21, 1
      %p106 = por %p104, %p105
      %p107 = scmp.ne.s32.totalorder %s99, %s102
      %p108 = scmp.eq.s32.totalorder %s21, 0
      %p109 = por %p107, %p108
      %p110 = scmp.ne.s32.totalorder %s99, %s102
      %p111 = scmp.eq.s32.totalorder %s26, 1
      %p112 = por %p110, %p111
      %p113 = scmp.ne.s32.totalorder %s102, %s103
      %p114 = scmp.eq.s32.totalorder %s26, 0
      %p115 = por %p113, %p114
      %p116 = scmp.ne.s32.totalorder %s102, %s103
      %p117 = scmp.eq.s32.totalorder %s27, 1
      %p118 = por %p116, %p117
      %p120 = scmp.ne.s32.totalorder %s103, %s119
      %p121 = scmp.eq.s32.totalorder %s27, 0
      %p122 = por %p120, %p121
      %s123 = ssub.s32 %s21, %s28
      %p124 = scmp.eq.s32.totalorder %s123, 0
      %s126 = sadd.s32 %s125, 1
      %s127 = scalar_select %p124, %s125, %s126
      %p130 = pneg %p124
      %p131 = scmp.eq.s32.totalorder %s21, 1
      %p132 = por %p130, %p131
      %p133 = scmp.ne.s32.totalorder %s125, %s128
      %p134 = scmp.eq.s32.totalorder %s21, 0
      %p135 = por %p133, %p134
      %p136 = scmp.ne.s32.totalorder %s125, %s128
      %p137 = scmp.eq.s32.totalorder %s26, 1
      %p138 = por %p136, %p137
      %p139 = scmp.ne.s32.totalorder %s128, %s129
      %p140 = scmp.eq.s32.totalorder %s26, 0
      %p141 = por %p139, %p140
      %p142 = scmp.ne.s32.totalorder %s128, %s129
      %p143 = scmp.eq.s32.totalorder %s27, 1
      %p144 = por %p142, %p143
      %p146 = scmp.ne.s32.totalorder %s129, %s145
      %p147 = scmp.eq.s32.totalorder %s27, 0
      %p148 = por %p146, %p147
      %p149 = scmp.le.s32.totalorder 1, %s21
      %p150 = scmp.lt.s32.totalorder %s21, 3
      %p151 = pnand %p149, %p150
      %p152 = pneg %p151
      // Predicated region
      $region9: #{tpu_custom_call.1} parent=5 // pred_check
        _
      $region10: #{tpu_custom_call.1} parent=5 // pred_check_branch
        %154 = sbr.rel (%p151) target = $region12
      $region11: #{tpu_custom_call.1} parent=5 // pred_region
        %s155 = ssub.s32 %s21, 1
        // Predicated region
        $region13: #{tpu_custom_call.1} parent=11 // pred_check
          %p156 = pneg %p68
        $region14: #{tpu_custom_call.1} parent=11 // pred_check_branch
          %158 = sbr.rel (%p156) target = $region16
        $region15: #{tpu_custom_call.1} parent=11 // pred_region
          %160 = vsyncadd [#allocation6], 0
          %s161 = sshll.u32 %s1, 4
          %s162 = int_to_ptr.hbm [resolvable:$true] %s161
          %s163 = sshll.u32 [#allocation5], 4
          %s164 = int_to_ptr.vmem [resolvable:$true] %s163
          %169 = dma.hbm_to_vmem [thread:$0]  %s162, 8192, %s164, [#allocation6], 512, 512, 32
        $region16: #{tpu_custom_call.1} parent=11 // pred_fallthru
          _
        // Predicated region
        $region17: #{tpu_custom_call.1} parent=11 // pred_check
          %p170 = pneg %p89
        $region18: #{tpu_custom_call.1} parent=11 // pred_check_branch
          %172 = sbr.rel (%p170) target = $region20
        $region19: #{tpu_custom_call.1} parent=11 // pred_region
          %174 = vsyncadd [#allocation6], 0
          %s176 = sshll.u32 %s2, 4
          %s177 = int_to_ptr.hbm [resolvable:$true] %s176
          %s178 = sshll.u32 [#allocation7], 4
          %s179 = int_to_ptr.vmem [resolvable:$true] %s178
          %181 = dma.hbm_to_vmem [thread:$0]  %s177, 64, %s179, [#allocation6]
        $region20: #{tpu_custom_call.1} parent=11 // pred_fallthru
          _
      $region12: #{tpu_custom_call.1} parent=5 // pred_fallthru
        _
      %p182 = scmp.lt.s32.totalorder %s21, 2
      // Predicated region
      $region21: #{tpu_custom_call.1} parent=5 // pred_check
        %p183 = pneg %p182
      $region22: #{tpu_custom_call.1} parent=5 // pred_check_branch
        %185 = sbr.rel (%p183) target = $region24
      $region23: #{tpu_custom_call.1} parent=5 // pred_region
        // Predicated region
        $region25: #{tpu_custom_call.1} parent=23 // pred_check
          %p186 = pneg %p41
        $region26: #{tpu_custom_call.1} parent=23 // pred_check_branch
          %188 = sbr.rel (%p186) target = $region28
        $region27: #{tpu_custom_call.1} parent=23 // pred_region
          %s189 = sand.u32 %s31, 1
          %s190 = scalar_lea.sflag [#allocation3], %s189
          %s191 = sand.u32 %s31, 1
          %s192 = smul.addr %s191, 8
          %s193 = scalar_lea.vmem [#allocation2], %s192
          %195 = vsyncadd %s190, 0
          %s196 = smul.addr %s21, 8
          %s197 = scalar_lea.hbm %s0, %s196
          %s199 = sshll.u32 %s197, 4
          %s200 = int_to_ptr.hbm [resolvable:$true] %s199
          %s201 = sshll.u32 %s193, 4
          %s202 = int_to_ptr.vmem [resolvable:$true] %s201
          %204 = dma.hbm_to_vmem [thread:$0]  %s200, 128, %s202, %s190
        $region28: #{tpu_custom_call.1} parent=23 // pred_fallthru
          _
      $region24: #{tpu_custom_call.1} parent=5 // pred_fallthru
        _
      %p205 = scmp.le.s32.totalorder 1, %s21
      %p206 = scmp.lt.s32.totalorder %s21, 3
      %p207 = pnand %p205, %p206
      %p208 = pneg %p207
      // Predicated region
      $region29: #{tpu_custom_call.1} parent=5 // pred_check
        _
      $region30: #{tpu_custom_call.1} parent=5 // pred_check_branch
        %210 = sbr.rel (%p207) target = $region32
      $region31: #{tpu_custom_call.1} parent=5 // pred_region
        %s211 = ssub.s32 %s21, 1
        %s212 = sand.u32 %s34, 1
        %s213 = scalar_lea.sflag [#allocation3], %s212
        %s214 = sand.u32 %s34, 1
        %s215 = smul.addr %s214, 8
        %s216 = scalar_lea.vmem [#allocation2], %s215
        // Predicated region
        $region33: #{tpu_custom_call.1} parent=31 // pred_check
          %p217 = pneg %p47
        $region34: #{tpu_custom_call.1} parent=31 // pred_check_branch
          %219 = sbr.rel (%p217) target = $region36
        $region35: #{tpu_custom_call.1} parent=31 // pred_region
          %221 = dma.done %s213, 128
        $region36: #{tpu_custom_call.1} parent=31 // pred_fallthru
          _
        // Predicated region
        $region37: #{tpu_custom_call.1} parent=31 // pred_check
          %p222 = pneg %p68
        $region38: #{tpu_custom_call.1} parent=31 // pred_check_branch
          %224 = sbr.rel (%p222) target = $region40
        $region39: #{tpu_custom_call.1} parent=31 // pred_region
          %226 = dma.done [#allocation6], 8192
        $region40: #{tpu_custom_call.1} parent=31 // pred_fallthru
          _
        // Predicated region
        $region41: #{tpu_custom_call.1} parent=31 // pred_check
          %p227 = pneg %p89
        $region42: #{tpu_custom_call.1} parent=31 // pred_check_branch
          %229 = sbr.rel (%p227) target = $region44
        $region43: #{tpu_custom_call.1} parent=31 // pred_region
          %231 = dma.done [#allocation6], 64
        $region44: #{tpu_custom_call.1} parent=31 // pred_fallthru
          _
        %s232 = sand.u32 %s34, 1
        %s233 = scalar_lea.sflag [#allocation3], %s232
        %s234 = sand.u32 %s34, 1
        %s235 = smul.addr %s234, 8
        %s236 = scalar_lea.vmem [#allocation2], %s235
        %p237 = pneg %p47
        %p238 = pneg %p44
        %p239 = pneg %p68
        %p240 = pneg %p65
        %p241 = pneg %p89
        %p242 = pneg %p86
        %p243 = pneg %p115
        %p244 = pneg %p112
        %s245 = sand.u32 %s102, 1
        %s246 = scalar_lea.sflag [#allocation4], %s245
        %s247 = sand.u32 %s102, 1
        %s248 = smul.addr %s247, 16
        %s249 = scalar_lea.vmem [#allocation8], %s248
        %p250 = pneg %p141
        %p251 = pneg %p138
        %s252 = sand.u32 %s128, 1
        %s253 = scalar_lea.sflag [#allocation10], %s252
        %s254 = sand.u32 %s128, 1
        %s255 = smul.addr %s254, 16
        %s256 = scalar_lea.vmem [#allocation9], %s255
        %v257 = vld [vmem:[%s216] sm:$0xff]
        %v258 = vld [vmem:[#allocation5] sm:$0xff]
        %v259 = vld [vmem:[#allocation5 + $0x8] sm:$0xff]
        %v260 = vld [vmem:[#allocation5 + $0x10] sm:$0xff]
        %v261 = vld [vmem:[#allocation5 + $0x18] sm:$0xff]
        %v262 = vld [vmem:[#allocation5 + $0x20] sm:$0xff]
        %v263 = vld [vmem:[#allocation5 + $0x28] sm:$0xff]
        %v264 = vld [vmem:[#allocation5 + $0x30] sm:$0xff]
        %v265 = vld [vmem:[#allocation5 + $0x38] sm:$0xff]
        %v266 = vld [vmem:[#allocation5 + $0x40] sm:$0xff]
        %v267 = vld [vmem:[#allocation5 + $0x48] sm:$0xff]
        %v268 = vld [vmem:[#allocation5 + $0x50] sm:$0xff]
        %v269 = vld [vmem:[#allocation5 + $0x58] sm:$0xff]
        %v270 = vld [vmem:[#allocation5 + $0x60] sm:$0xff]
        %v271 = vld [vmem:[#allocation5 + $0x68] sm:$0xff]
        %v272 = vld [vmem:[#allocation5 + $0x70] sm:$0xff]
        %v273 = vld [vmem:[#allocation5 + $0x78] sm:$0xff]
        %v274 = vld [vmem:[#allocation5 + $0x80] sm:$0xff]
        %v275 = vld [vmem:[#allocation5 + $0x88] sm:$0xff]
        %v276 = vld [vmem:[#allocation5 + $0x90] sm:$0xff]
        %v277 = vld [vmem:[#allocation5 + $0x98] sm:$0xff]
        %v278 = vld [vmem:[#allocation5 + $0xa0] sm:$0xff]
        %v279 = vld [vmem:[#allocation5 + $0xa8] sm:$0xff]
        %v280 = vld [vmem:[#allocation5 + $0xb0] sm:$0xff]
        %v281 = vld [vmem:[#allocation5 + $0xb8] sm:$0xff]
        %v282 = vld [vmem:[#allocation5 + $0xc0] sm:$0xff]
        %v283 = vld [vmem:[#allocation5 + $0xc8] sm:$0xff]
        %v284 = vld [vmem:[#allocation5 + $0xd0] sm:$0xff]
        %v285 = vld [vmem:[#allocation5 + $0xd8] sm:$0xff]
        %v286 = vld [vmem:[#allocation5 + $0xe0] sm:$0xff]
        %v287 = vld [vmem:[#allocation5 + $0xe8] sm:$0xff]
        %v288 = vld [vmem:[#allocation5 + $0xf0] sm:$0xff]
        %v289 = vld [vmem:[#allocation5 + $0xf8] sm:$0xff]
        %v290 = vld [vmem:[#allocation5 + $0x100] sm:$0xff]
        %v291 = vld [vmem:[#allocation5 + $0x108] sm:$0xff]
        %v292 = vld [vmem:[#allocation5 + $0x110] sm:$0xff]
        %v293 = vld [vmem:[#allocation5 + $0x118] sm:$0xff]
        %v294 = vld [vmem:[#allocation5 + $0x120] sm:$0xff]
        %v295 = vld [vmem:[#allocation5 + $0x128] sm:$0xff]
        %v296 = vld [vmem:[#allocation5 + $0x130] sm:$0xff]
        %v297 = vld [vmem:[#allocation5 + $0x138] sm:$0xff]
        %v298 = vld [vmem:[#allocation5 + $0x140] sm:$0xff]
        %v299 = vld [vmem:[#allocation5 + $0x148] sm:$0xff]
        %v300 = vld [vmem:[#allocation5 + $0x150] sm:$0xff]
        %v301 = vld [vmem:[#allocation5 + $0x158] sm:$0xff]
        %v302 = vld [vmem:[#allocation5 + $0x160] sm:$0xff]
        %v303 = vld [vmem:[#allocation5 + $0x168] sm:$0xff]
        %v304 = vld [vmem:[#allocation5 + $0x170] sm:$0xff]
        %v305 = vld [vmem:[#allocation5 + $0x178] sm:$0xff]
        %v306 = vld [vmem:[#allocation5 + $0x180] sm:$0xff]
        %v307 = vld [vmem:[#allocation5 + $0x188] sm:$0xff]
        %v308 = vld [vmem:[#allocation5 + $0x190] sm:$0xff]
        %v309 = vld [vmem:[#allocation5 + $0x198] sm:$0xff]
        %v310 = vld [vmem:[#allocation5 + $0x1a0] sm:$0xff]
        %v311 = vld [vmem:[#allocation5 + $0x1a8] sm:$0xff]
        %v312 = vld [vmem:[#allocation5 + $0x1b0] sm:$0xff]
        %v313 = vld [vmem:[#allocation5 + $0x1b8] sm:$0xff]
        %v314 = vld [vmem:[#allocation5 + $0x1c0] sm:$0xff]
        %v315 = vld [vmem:[#allocation5 + $0x1c8] sm:$0xff]
        %v316 = vld [vmem:[#allocation5 + $0x1d0] sm:$0xff]
        %v317 = vld [vmem:[#allocation5 + $0x1d8] sm:$0xff]
        %v318 = vld [vmem:[#allocation5 + $0x1e0] sm:$0xff]
        %v319 = vld [vmem:[#allocation5 + $0x1e8] sm:$0xff]
        %v320 = vld [vmem:[#allocation5 + $0x1f0] sm:$0xff]
        %v321 = vld [vmem:[#allocation5 + $0x1f8] sm:$0xff]
        %v322 = vld [vmem:[#allocation7] sm:$0xf]
        %v324 = vperm.slane %v322, 0
        %v325 = vperm.slane %v322, 1
        %v326 = vperm.slane %v322, 2
        %v327 = vperm.slane %v322, 3
        %332 = vmatpush.msra.mxu0 %v318
        %333 = vmatpush.msra.mxu0 %v314
        %334 = vmatpush.msra.mxu0 %v310
        %335 = vmatpush.msra.mxu0 %v306
        %336 = vmatpush.msra.mxu0 %v302
        %337 = vmatpush.msra.mxu0 %v298
        %338 = vmatpush.msra.mxu0 %v294
        %339 = vmatpush.msra.mxu0 %v290
        %340 = vmatpush.msra.mxu0 %v286
        %341 = vmatpush.msra.mxu0 %v282
        %342 = vmatpush.msra.mxu0 %v278
        %343 = vmatpush.msra.mxu0 %v274
        %344 = vmatpush.msra.mxu0 %v270
        %345 = vmatpush.msra.mxu0 %v266
        %346 = vmatpush.msra.mxu0 %v262
        %347 = vmatpush.msra.mxu0 %v258
        %348 = vmatmul.f32.gmra.mxu0 %v257
        %v349 = vpop.f32.mrf.mxu0
        %v350 = vadd.f32 %v324, %v349
        %351 = vdwg.mxu0
        %352 = vmatpush.msra.mxu0 %v319
        %353 = vmatpush.msra.mxu0 %v315
        %354 = vmatpush.msra.mxu0 %v311
        %355 = vmatpush.msra.mxu0 %v307
        %356 = vmatpush.msra.mxu0 %v303
        %357 = vmatpush.msra.mxu0 %v299
        %358 = vmatpush.msra.mxu0 %v295
        %359 = vmatpush.msra.mxu0 %v291
        %360 = vmatpush.msra.mxu0 %v287
        %361 = vmatpush.msra.mxu0 %v283
        %362 = vmatpush.msra.mxu0 %v279
        %363 = vmatpush.msra.mxu0 %v275
        %364 = vmatpush.msra.mxu0 %v271
        %365 = vmatpush.msra.mxu0 %v267
        %366 = vmatpush.msra.mxu0 %v263
        %367 = vmatpush.msra.mxu0 %v259
        %368 = vmatmul.f32.gmra.mxu0 %v257
        %v369 = vpop.f32.mrf.mxu0
        %v370 = vadd.f32 %v325, %v369
        %371 = vdwg.mxu0
        %372 = vmatpush.msra.mxu0 %v320
        %373 = vmatpush.msra.mxu0 %v316
        %374 = vmatpush.msra.mxu0 %v312
        %375 = vmatpush.msra.mxu0 %v308
        %376 = vmatpush.msra.mxu0 %v304
        %377 = vmatpush.msra.mxu0 %v300
        %378 = vmatpush.msra.mxu0 %v296
        %379 = vmatpush.msra.mxu0 %v292
        %380 = vmatpush.msra.mxu0 %v288
        %381 = vmatpush.msra.mxu0 %v284
        %382 = vmatpush.msra.mxu0 %v280
        %383 = vmatpush.msra.mxu0 %v276
        %384 = vmatpush.msra.mxu0 %v272
        %385 = vmatpush.msra.mxu0 %v268
        %386 = vmatpush.msra.mxu0 %v264
        %387 = vmatpush.msra.mxu0 %v260
        %388 = vmatmul.f32.gmra.mxu0 %v257
        %v389 = vpop.f32.mrf.mxu0
        %v390 = vadd.f32 %v326, %v389
        %391 = vdwg.mxu0
        %392 = vmatpush.msra.mxu0 %v321
        %393 = vmatpush.msra.mxu0 %v317
        %394 = vmatpush.msra.mxu0 %v313
        %395 = vmatpush.msra.mxu0 %v309
        %396 = vmatpush.msra.mxu0 %v305
        %397 = vmatpush.msra.mxu0 %v301
        %398 = vmatpush.msra.mxu0 %v297
        %399 = vmatpush.msra.mxu0 %v293
        %400 = vmatpush.msra.mxu0 %v289
        %401 = vmatpush.msra.mxu0 %v285
        %402 = vmatpush.msra.mxu0 %v281
        %403 = vmatpush.msra.mxu0 %v277
        %404 = vmatpush.msra.mxu0 %v273
        %405 = vmatpush.msra.mxu0 %v269
        %406 = vmatpush.msra.mxu0 %v265
        %407 = vmatpush.msra.mxu0 %v261
        %408 = vmatmul.f32.gmra.mxu0 %v257
        %v409 = vpop.f32.mrf.mxu0
        %v410 = vadd.f32 %v327, %v409
        %411 = vdwg.mxu0
        %412 = vst [vmem:[%s249] sm:$0xff] %v350
        %413 = vst [vmem:[%s249 + $0x8] sm:$0xff] %v370
        %414 = vst [vmem:[%s256] sm:$0xff] %v390
        %415 = vst [vmem:[%s256 + $0x8] sm:$0xff] %v410
        %s416 = sand.u32 %s102, 1
        %s417 = scalar_lea.sflag [#allocation4], %s416
        %s418 = sand.u32 %s102, 1
        %s419 = smul.addr %s418, 16
        %s420 = scalar_lea.vmem [#allocation8], %s419
        %s421 = sand.u32 %s128, 1
        %s422 = scalar_lea.sflag [#allocation10], %s421
        %s423 = sand.u32 %s128, 1
        %s424 = smul.addr %s423, 16
        %s425 = scalar_lea.vmem [#allocation9], %s424
        // Predicated region
        $region45: #{tpu_custom_call.1} parent=31 // pred_check
          %p426 = pneg %p112
        $region46: #{tpu_custom_call.1} parent=31 // pred_check_branch
          %428 = sbr.rel (%p426) target = $region48
        $region47: #{tpu_custom_call.1} parent=31 // pred_region
          %430 = vsyncadd %s417, 0
          %s431 = smul.addr %s26, 2
          %s432 = smul.addr %s431, 8
          %s433 = scalar_lea.hbm %s3, %s432
          %s435 = sshll.u32 %s420, 4
          %s436 = int_to_ptr.vmem [resolvable:$true] %s435
          %s437 = sshll.u32 %s433, 4
          %s438 = int_to_ptr.hbm [resolvable:$true] %s437
          %440 = dma.vmem_to_hbm [thread:$0]  %s436, 256, %s438, %s417
        $region48: #{tpu_custom_call.1} parent=31 // pred_fallthru
          _
        // Predicated region
        $region49: #{tpu_custom_call.1} parent=31 // pred_check
          %p441 = pneg %p138
        $region50: #{tpu_custom_call.1} parent=31 // pred_check_branch
          %443 = sbr.rel (%p441) target = $region52
        $region51: #{tpu_custom_call.1} parent=31 // pred_region
          %445 = vsyncadd %s422, 0
          %s446 = smul.addr %s26, 2
          %s447 = smul.addr %s446, 8
          %s448 = scalar_lea.hbm %s4, %s447
          %s450 = sshll.u32 %s425, 4
          %s451 = int_to_ptr.vmem [resolvable:$true] %s450
          %s452 = sshll.u32 %s448, 4
          %s453 = int_to_ptr.hbm [resolvable:$true] %s452
          %455 = dma.vmem_to_hbm [thread:$0]  %s451, 256, %s453, %s422
        $region52: #{tpu_custom_call.1} parent=31 // pred_fallthru
          _
      $region32: #{tpu_custom_call.1} parent=5 // pred_fallthru
        _
      %p456 = scmp.le.s32.totalorder 2, %s21
      // Predicated region
      $region53: #{tpu_custom_call.1} parent=5 // pred_check
        %p457 = pneg %p456
      $region54: #{tpu_custom_call.1} parent=5 // pred_check_branch
        %459 = sbr.rel (%p457) target = $region56
      $region55: #{tpu_custom_call.1} parent=5 // pred_region
        %s460 = ssub.s32 %s21, 2
        // Predicated region
        $region57: #{tpu_custom_call.1} parent=55 // pred_check
          %p461 = pneg %p118
        $region58: #{tpu_custom_call.1} parent=55 // pred_check_branch
          %463 = sbr.rel (%p461) target = $region60
        $region59: #{tpu_custom_call.1} parent=55 // pred_region
          %s464 = sand.u32 %s103, 1
          %s465 = scalar_lea.sflag [#allocation4], %s464
          %s466 = sand.u32 %s103, 1
          %s467 = smul.addr %s466, 16
          %s468 = scalar_lea.vmem [#allocation8], %s467
          %470 = dma.done %s465, 256
        $region60: #{tpu_custom_call.1} parent=55 // pred_fallthru
          _
        // Predicated region
        $region61: #{tpu_custom_call.1} parent=55 // pred_check
          %p471 = pneg %p144
        $region62: #{tpu_custom_call.1} parent=55 // pred_check_branch
          %473 = sbr.rel (%p471) target = $region64
        $region63: #{tpu_custom_call.1} parent=55 // pred_region
          %s474 = sand.u32 %s129, 1
          %s475 = scalar_lea.sflag [#allocation10], %s474
          %s476 = sand.u32 %s129, 1
          %s477 = smul.addr %s476, 16
          %s478 = scalar_lea.vmem [#allocation9], %s477
          %480 = dma.done %s475, 256
        $region64: #{tpu_custom_call.1} parent=55 // pred_fallthru
          _
      $region56: #{tpu_custom_call.1} parent=5 // pred_fallthru
        _
    $region6: #{tpu_custom_call.1} parent=1 // loop_footer
      %s25 = sadd.s32 1, %s21
    $region7: #{tpu_custom_call.1} parent=1 // loop_footer_branch
      %20 = sbr.rel target = $region3
    $region8: #{tpu_custom_call.1} parent=1 // loop_exit
      _
    %481 = vsyncpa [#allocation3], 1
    %s482 = scalar_lea.sflag [#allocation3], 1
    %483 = vsyncpa %s482, 1
    %484 = vsyncpa [#allocation6], 1
    %485 = vsyncpa [#allocation4], 1
    %s486 = scalar_lea.sflag [#allocation4], 1
    %487 = vsyncpa %s486, 1
    %488 = vsyncpa [#allocation10], 1
    %s489 = scalar_lea.sflag [#allocation10], 1
    %490 = vsyncpa %s489, 1

</llo_original>
